<compile_context>
chip_gen: v5e
topology: v5e:2x2
jax: 0.10.0
libtpu: 0.0.40
codegen_flags: <defaults>
</compile_context>

<pallas_src>
import jax
import jax.numpy as jnp
from jax import lax
from jax.experimental import pallas as pl
from jax.experimental.pallas import tpu as pltpu


def _type_rel_rec_kernel(v_ref, bias_ref, cand_ref, out_ref):
    # v_ref    : (Bp, Dbert)  hoisted last @ W   (resident across grid)
    # bias_ref : (Bp, 1)      hoisted last @ b   (resident, f32)
    # cand_ref : (TC, Dbert)  streamed candidate tile (compute dtype)
    # out_ref  : (Bp, TC)     f32 output tile
    #
    # y = v @ cand.T : contract Dbert directly (MXU-native, no XLU transpose),
    # accumulate in f32, then a single VPU broadcast-add for the bias.
    y = lax.dot_general(v_ref[...], cand_ref[...],
                        (((1,), (1,)), ((), ())),
                        preferred_element_type=jnp.float32)
    out_ref[...] = (y + bias_ref[...]).astype(out_ref.dtype)


def type_rel_rec(encoder_ctx, candidate, weight, bias, *,
                 tile_c=None, compute_dtype=jnp.float32):
    """y = squeeze(matmul(encoder_ctx, (candidate @ W.T + b).T)[:, -1:, :])."""
    B, S, E = encoder_ctx.shape
    C, Dbert = candidate.shape
    assert weight.shape == (E, Dbert)
    assert bias.shape == (E,)

    # ---- Hoisted wrapper compute (tiny, done once) --------------------------
    # Only the last token is ever used: slice it before any matmul so only
    # B*E elements of encoder_ctx are touched.
    last = encoder_ctx[:, S - 1, :]                                   # (B, E)
    v = jnp.dot(last, weight, preferred_element_type=jnp.float32)     # (B, Dbert)
    bias_col = jnp.dot(last, bias,
                       preferred_element_type=jnp.float32)[:, None]   # (B, 1)

    # Sublane-dense B: pad up to a multiple of 8 (zero rows, sliced off after).
    B_pad = -(-B // 8) * 8
    if B_pad != B:
        v = jnp.pad(v, ((0, B_pad - B), (0, 0)))
        bias_col = jnp.pad(bias_col, ((0, B_pad - B), (0, 0)))

    # Downcast the dominant HBM stream BEFORE the kernel so the DMA itself
    # moves fewer bytes (bf16 path halves candidate traffic; the kernel is
    # HBM-bound on this stream).
    v = v.astype(compute_dtype)
    if candidate.dtype != compute_dtype:
        candidate = candidate.astype(compute_dtype)

    # ---- Tiling --------------------------------------------------------------
    # Bigger tiles amortize the ~0.35 us per-grid-step overhead.  Defaults keep
    # the double-buffered candidate tile ~6 MiB at Dbert=768, which fits every
    # generation's scoped-VMEM default (incl. v5e's 16 MiB) with headroom.
    if tile_c is None:
        tile_c = 2048 if jnp.dtype(compute_dtype).itemsize <= 2 else 1024
    tc = C if C <= tile_c else tile_c
    grid = (pl.cdiv(C, tc),)

    cand_bytes = jnp.dtype(compute_dtype).itemsize
    cost = pl.CostEstimate(
        flops=2 * B_pad * Dbert * C,
        transcendentals=0,
        bytes_accessed=(cand_bytes * (C * Dbert + B_pad * Dbert)
                        + 4 * (B_pad + B_pad * C)),
    )

    out = pl.pallas_call(
        _type_rel_rec_kernel,
        out_shape=jax.ShapeDtypeStruct((B_pad, C), jnp.float32),
        grid=grid,
        in_specs=[
            pl.BlockSpec((B_pad, Dbert), lambda i: (0, 0)),   # v (resident)
            pl.BlockSpec((B_pad, 1), lambda i: (0, 0)),       # bias_col (resident)
            pl.BlockSpec((tc, Dbert), lambda i: (i, 0)),      # candidate tile (streamed)
        ],
        out_specs=pl.BlockSpec((B_pad, tc), lambda i: (0, i)),
        compiler_params=pltpu.CompilerParams(
            dimension_semantics=("parallel",)),               # 2x TC on v7x, no-op elsewhere
        cost_estimate=cost,
    )(v, bias_col, candidate)

    # Drop padded batch rows, then mirror torch.squeeze exactly.
    return jnp.squeeze(out[:B, :])


def reference(encoder_ctx, candidate, weight, bias):
    # Pure-JAX mirror of the exact PyTorch forward (full matmul + slice + squeeze).
    linear_out = (candidate @ weight.T + bias).T            # (E, C)
    x = jnp.matmul(encoder_ctx, linear_out)[:, -1:, :]      # (B, 1, C)
    return jnp.squeeze(x)                                   # (B, C)


if __name__ == "__main__":
    # Small shapes: batch=2, seq=8, bert_dim=32, emb_dim=32, candidates=8
    B, S, E, Dbert, C = 2, 8, 32, 32, 8

    key = jax.random.PRNGKey(0)
    k_ctx, k_cand, k_w, k_b = jax.random.split(key, 4)

    encoder_ctx = jax.random.normal(k_ctx, (B, S, E), dtype=jnp.float32)
    candidate = jax.random.normal(k_cand, (C, Dbert), dtype=jnp.float32)

    # Deterministic nn.Linear(bert_dim, emb_dim) parameters: weight (E, Dbert), bias (E,)
    bound = 1.0 / (Dbert ** 0.5)
    weight = jax.random.uniform(k_w, (E, Dbert), jnp.float32, -bound, bound)
    bias = jax.random.uniform(k_b, (E,), jnp.float32, -bound, bound)

    # f32 compute path — exact check against the PyTorch-style reference.
    y = jax.block_until_ready(type_rel_rec(encoder_ctx, candidate, weight, bias))
    y_ref = reference(encoder_ctx, candidate, weight, bias)
    assert y.shape == (B, C)
    assert jnp.allclose(y, y_ref, atol=1e-4, rtol=1e-4)

    # bf16 compute path (candidate downcast in the wrapper, f32 accumulation).
    y_bf16 = jax.block_until_ready(
        type_rel_rec(encoder_ctx, candidate, weight, bias,
                     compute_dtype=jnp.bfloat16))
    assert y_bf16.shape == (B, C)
    assert jnp.allclose(y_bf16, y_ref, atol=0.3, rtol=0.1)

    # TODO(synk): optional int8 (v5e/v6e) / fp8 (v7x) candidate quantization with
    # per-row scales would further cut the dominant HBM stream; not implemented.

    print("KERNEL_OK")
</pallas_src>

<mosaic_0001>
module attributes {stable_mosaic.version = 11 : i64} {
  func.func @_type_rel_rec_kernel(%arg0: i32, %arg1: memref<8x32xf32, #tpu.memory_space<vmem>>, %arg2: memref<8x1xf32, #tpu.memory_space<vmem>>, %arg3: memref<8x32xf32, #tpu.memory_space<vmem>>, %arg4: memref<8x8xf32, #tpu.memory_space<vmem>>) attributes {dimension_semantics = [#tpu.dimension_semantics<parallel>], iteration_bounds = array<i64: 1>, scalar_prefetch = 0 : i64, scratch_operands = 0 : i64, tpu.core_type = #tpu.core_type<tc>, window_params = [{pipeline_mode = #tpu.pipeline_mode<synchronous>, transform_indices = @transform_0, window_bounds = array<i64: 8, 32>}, {pipeline_mode = #tpu.pipeline_mode<synchronous>, transform_indices = @transform_1, window_bounds = array<i64: 8, 1>}, {transform_indices = @transform_2, window_bounds = array<i64: 8, 32>}, {transform_indices = @transform_3, window_bounds = array<i64: 8, 8>}]} {
    %c0 = arith.constant 0 : index
    %c0_0 = arith.constant 0 : index
    %0 = vector.load %arg1[%c0, %c0_0] : memref<8x32xf32, #tpu.memory_space<vmem>>, vector<8x32xf32>
    %c0_1 = arith.constant 0 : index
    %c0_2 = arith.constant 0 : index
    %1 = vector.load %arg3[%c0_1, %c0_2] : memref<8x32xf32, #tpu.memory_space<vmem>>, vector<8x32xf32>
    %cst = arith.constant dense<0.000000e+00> : vector<8x8xf32>
    %2 = tpu.matmul %0, %1, %cst {dimension_numbers = #tpu.dot_dimension_numbers<[1], [1], [0], [0], [0, 0, 1, 0], [], []>} : vector<8x32xf32>, vector<8x32xf32>, vector<8x8xf32> -> vector<8x8xf32>
    %c0_3 = arith.constant 0 : index
    %c0_4 = arith.constant 0 : index
    %3 = vector.load %arg2[%c0_3, %c0_4] : memref<8x1xf32, #tpu.memory_space<vmem>>, vector<8x1xf32>
    %4 = vector.broadcast %3 : vector<8x1xf32> to vector<8x8xf32>
    %5 = arith.addf %2, %4 : vector<8x8xf32>
    %c0_5 = arith.constant 0 : index
    %c0_6 = arith.constant 0 : index
    %6 = vector.load %arg4[%c0_5, %c0_6] : memref<8x8xf32, #tpu.memory_space<vmem>>, vector<8x8xf32>
    tpu.vector_store %arg4[%c0_5, %c0_6], %5 {strides = array<i32>} : memref<8x8xf32, #tpu.memory_space<vmem>>, vector<8x8xf32>,
    return
  }
  func.func @transform_0(%arg0: i32) -> (i32, i32) {
    %c0_i32 = arith.constant 0 : i32
    %c0_i32_0 = arith.constant 0 : i32
    %c0_i32_1 = arith.constant 0 : i32
    return %c0_i32, %c0_i32_0 : i32, i32
  }
  func.func @transform_1(%arg0: i32) -> (i32, i32) {
    %c0_i32 = arith.constant 0 : i32
    %c0_i32_0 = arith.constant 0 : i32
    %c0_i32_1 = arith.constant 0 : i32
    return %c0_i32, %c0_i32_0 : i32, i32
  }
  func.func @transform_2(%arg0: i32) -> (i32, i32) {
    %c0_i32 = arith.constant 0 : i32
    %c0_i32_0 = arith.constant 0 : i32
    return %arg0, %c0_i32 : i32, i32
  }
  func.func @transform_3(%arg0: i32) -> (i32, i32) {
    %c0_i32 = arith.constant 0 : i32
    %c0_i32_0 = arith.constant 0 : i32
    return %c0_i32, %arg0 : i32, i32
  }
}

</mosaic_0001>

<llo_original>
// kernel: tpu_custom_call.1
$region0: #{tpu_custom_call.1}
  #allocation0 [shape = 'u32[]', space=smem, size = 0x4, offset = 0x4, fixed_abs, tag = 'smem constant byte address 0x4 - core index']
  #allocation1 [shape = 'u32[72,128]{1,0:T(1,128)}', space=vmem, size = 0x9000, scoped, tag = 'internal scratch']
  %s0 = inlined_call_operand.vmem [shape: f32[8,32], index: 0, kind: input, shape index: {}]
  %s1 = inlined_call_operand.vmem [shape: f32[8,1], index: 1, kind: input, shape index: {}]
  %s2 = inlined_call_operand.hbm [shape: f32[8,32], index: 2, kind: input, shape index: {}]
  %s3 = inlined_call_operand.hbm [shape: f32[8,8], index: 3, kind: output, shape index: {}]
  %s4 = sld [smem:[#allocation0]]
  $region26: #{tpu_custom_call.1} parent=0
    _
  %s6 = ssub.s32 1, %s4
  %s7 = scalar_select 0, %s6, %s4
  $region1: #{tpu_custom_call.1} parent=0
    #allocation2 [shape = 'u8[4096]{0}', space=vmem, size = 0x1000, scoped, tag = 'input window, operand 2, single buffered']
    #allocation3 [shape = 's32[1]{0}', space=sflag, size = 0x4, scoped, tag = 'scoped memory for tpu_custom_call.1']
    #allocation4 [shape = 's32[1]{0}', space=sflag, size = 0x4, scoped, tag = 'scoped memory for tpu_custom_call.1']
    #allocation5 [shape = 'u8[4096]{0}', space=vmem, size = 0x1000, scoped, tag = 'output window, operand 0, single buffered']
    %8 = vsyncpa [#allocation3], 0
    %9 = vsyncpa [#allocation4], 0
    // Predicated region
    $region2: #{tpu_custom_call.1} parent=1 // pred_check
      _
    $region3: #{tpu_custom_call.1} parent=1 // pred_check_branch
      %11 = sbr.rel (0) target = $region5
    $region4: #{tpu_custom_call.1} parent=1 // pred_region
      _
    $region5: #{tpu_custom_call.1} parent=1 // pred_fallthru
      _
    // Predicated region
    $region6: #{tpu_custom_call.1} parent=1 // pred_check
      _
    $region7: #{tpu_custom_call.1} parent=1 // pred_check_branch
      %13 = sbr.rel (0) target = $region9
    $region8: #{tpu_custom_call.1} parent=1 // pred_region
      _
    $region9: #{tpu_custom_call.1} parent=1 // pred_fallthru
      _
    // Predicated region
    $region10: #{tpu_custom_call.1} parent=1 // pred_check
      _
    $region11: #{tpu_custom_call.1} parent=1 // pred_check_branch
      %15 = sbr.rel (0) target = $region13
    $region12: #{tpu_custom_call.1} parent=1 // pred_region
      %17 = vsyncadd [#allocation3], 0
      %s19 = sshll.u32 %s2, 4
      %s20 = int_to_ptr.hbm [resolvable:$true] %s19
      %s21 = sshll.u32 [#allocation2], 4
      %s22 = int_to_ptr.vmem [resolvable:$true] %s21
      %24 = dma.hbm_to_vmem [thread:$0]  %s20, 128, %s22, [#allocation3]
    $region13: #{tpu_custom_call.1} parent=1 // pred_fallthru
      _
    // Predicated region
    $region14: #{tpu_custom_call.1} parent=1 // pred_check
      _
    $region15: #{tpu_custom_call.1} parent=1 // pred_check_branch
      %26 = sbr.rel (0) target = $region17
    $region16: #{tpu_custom_call.1} parent=1 // pred_region
      %28 = dma.done [#allocation3], 128
    $region17: #{tpu_custom_call.1} parent=1 // pred_fallthru
      _
    %v29 = vld [vmem:[%s0] sm:$0xff]
    %v30 = vld [vmem:[#allocation2] sm:$0xff]
    %v31 = vld [vmem:[%s1] sm:$0xff]
    %33 = vset.pattern.permute.xlu0 0
    %34 = vperm.xlu0 %33, %v31
    %v35 = vpop.permute.xlu0 %34
    %vm37 = vcmask 261120
    %v39 = vsel %vm37, %v29, 0
    %v42 = vsel %vm37, %v30, 0
    %44 = vmatpush.xpose.msra.mxu0 0.0
    %45 = vmatpush.xpose.msra.mxu0 0.0
    %46 = vmatpush.xpose.msra.mxu0 0.0
    %47 = vmatpush.xpose.msra.mxu0 0.0
    %48 = vmatpush.xpose.msra.mxu0 0.0
    %49 = vmatpush.xpose.msra.mxu0 0.0
    %50 = vmatpush.xpose.msra.mxu0 0.0
    %51 = vmatpush.xpose.msra.mxu0 0.0
    %52 = vmatpush.xpose.msra.mxu0 0.0
    %53 = vmatpush.xpose.msra.mxu0 0.0
    %54 = vmatpush.xpose.msra.mxu0 0.0
    %55 = vmatpush.xpose.msra.mxu0 0.0
    %56 = vmatpush.xpose.msra.mxu0 0.0
    %57 = vmatpush.xpose.msra.mxu0 0.0
    %58 = vmatpush.xpose.msra.mxu0 0.0
    %59 = vmatpush.xpose.msra.mxu0 %v42
    %60 = vmatmul.f32.gmra.mxu0 %v39
    %v61 = vpop.f32.mrf.mxu0
    %v62 = vadd.f32 %v35, %v61
    %63 = vdwg.mxu0
    %vm64 = vcmask 64512
    %65 = vst.msk [vmem:[#allocation5] sm:$0xff] %vm64, %v62
    // Predicated region
    $region18: #{tpu_custom_call.1} parent=1 // pred_check
      _
    $region19: #{tpu_custom_call.1} parent=1 // pred_check_branch
      %67 = sbr.rel (0) target = $region21
    $region20: #{tpu_custom_call.1} parent=1 // pred_region
      %69 = vsyncadd [#allocation4], 0
      %s71 = sshll.u32 [#allocation5], 4
      %s72 = int_to_ptr.vmem [resolvable:$true] %s71
      %s73 = sshll.u32 %s3, 4
      %s74 = int_to_ptr.hbm [resolvable:$true] %s73
      %76 = dma.vmem_to_hbm [thread:$0]  %s72, 128, %s74, [#allocation4]
    $region21: #{tpu_custom_call.1} parent=1 // pred_fallthru
      _
    // Predicated region
    $region22: #{tpu_custom_call.1} parent=1 // pred_check
      _
    $region23: #{tpu_custom_call.1} parent=1 // pred_check_branch
      %78 = sbr.rel (0) target = $region25
    $region24: #{tpu_custom_call.1} parent=1 // pred_region
      %80 = dma.done [#allocation4], 128
    $region25: #{tpu_custom_call.1} parent=1 // pred_fallthru
      _
    %81 = vsyncpa [#allocation3], 1
    %82 = vsyncpa [#allocation4], 1

</llo_original>
